<compile_context>
chip_gen: v6e
topology: v6e:2x2x1
jax: 0.10.0
libtpu: 0.0.40
codegen_flags: <defaults>
</compile_context>

<pallas_src>
import jax
import jax.numpy as jnp
from jax.experimental import pallas as pl
from jax.experimental.pallas import tpu as pltpu


def _round_up(x, m):
    return ((x + m - 1) // m) * m


def make_params(weight, bias):
    """One-time parameter prep (do at init time, not per forward call).

    weight: (N, K) PyTorch layout; bias: (N,)
    Returns w_t: (K, N) transposed weight, b2d: (1, N) bias.
    """
    w_t = jnp.asarray(weight).T                    # (K, N)
    b2d = jnp.asarray(bias).reshape(1, -1)         # (1, N)
    return w_t, b2d


def linear_relu_kernel(x_ref, w_ref, b_ref, o_ref):
    # One MXU matmul per batch tile + VPU bias/relu.  Weight & bias blocks
    # have constant index_maps, so they stay VMEM-resident across the grid.
    y = jnp.dot(x_ref[...], w_ref[...], preferred_element_type=jnp.float32)
    o_ref[...] = jnp.maximum(y + b_ref[...], 0.0).astype(o_ref.dtype)


def linear_relu(x, w_t, b2d, *, tile_b=4096, min_pallas_batch=512,
                force_pallas=False):
    """x: (B, K); w_t: (K, N) pre-transposed weight; b2d: (1, N) bias."""
    B, K = x.shape
    n_out = w_t.shape[1]

    # Tiny-batch fast path: XLA's fused dot+bias+relu beats kernel launch
    # overhead for the module's nominal small-batch usage.
    if not force_pallas and B < min_pallas_batch:
        return jnp.maximum(x @ w_t + b2d, 0.0)

    # Batch tile: multiple of 8 (f32 sublane); shrink for small B.
    tile_b = min(tile_b, _round_up(B, 8))
    grid_b = pl.cdiv(B, tile_b)

    return pl.pallas_call(
        linear_relu_kernel,
        out_shape=jax.ShapeDtypeStruct((B, n_out), x.dtype),
        grid=(grid_b,),
        in_specs=[
            # Streaming batch tiles of x (last dim == full K, so no 128 rule).
            pl.BlockSpec((tile_b, K), lambda i: (i, 0),
                         memory_space=pltpu.MemorySpace.VMEM),
            # Weight & bias: loaded once, resident across all batch tiles.
            pl.BlockSpec((K, n_out), lambda i: (0, 0),
                         memory_space=pltpu.MemorySpace.VMEM),
            pl.BlockSpec((1, n_out), lambda i: (0, 0),
                         memory_space=pltpu.MemorySpace.VMEM),
        ],
        # Narrow (n_out == 10) output block: last dim equals the full array
        # dim, so this is legal; masked stores are irrelevant (HBM-bound).
        out_specs=pl.BlockSpec((tile_b, n_out), lambda i: (i, 0),
                               memory_space=pltpu.MemorySpace.VMEM),
        compiler_params=pltpu.CompilerParams(
            dimension_semantics=("parallel",)),
    )(x, w_t, b2d)


if __name__ == "__main__":
    key = jax.random.PRNGKey(0)
    k_x, k_w, k_b, k_x2 = jax.random.split(key, 4)

    B, IN, OUT = 8, 100, 10
    # Deterministic synthetic params (PyTorch default init: U(-1/sqrt(IN), 1/sqrt(IN)))
    bound = 1.0 / jnp.sqrt(jnp.float32(IN))
    weight = jax.random.uniform(k_w, (OUT, IN), jnp.float32, -bound, bound)
    bias = jax.random.uniform(k_b, (OUT,), jnp.float32, -bound, bound)
    x = jax.random.normal(k_x, (B, IN), jnp.float32)

    # One-time parameter prep (hoisted out of the per-call path).
    w_t, b2d = make_params(weight, bias)
    ref_fn = lambda xx: jnp.maximum(xx @ weight.T + bias, 0.0)

    # 1) Nominal tiny-batch usage: small-B fast path (plain jnp).
    out_fast = linear_relu(x, w_t, b2d)
    jax.block_until_ready(out_fast)
    assert out_fast.shape == (B, OUT)
    assert jnp.allclose(out_fast, ref_fn(x), atol=1e-5, rtol=1e-5)

    # 2) Same tiny batch, forced through the Pallas kernel (single tile).
    out_small = linear_relu(x, w_t, b2d, force_pallas=True)
    jax.block_until_ready(out_small)
    assert out_small.shape == (B, OUT)
    assert jnp.allclose(out_small, ref_fn(x), atol=1e-5, rtol=1e-5)

    # 3) Larger, non-tile-aligned batch: exercises the multi-step grid and the
    #    ragged last block (no wrapper-side pad/slice passes).
    B2 = 300
    x2 = jax.random.normal(k_x2, (B2, IN), jnp.float32)
    out2 = linear_relu(x2, w_t, b2d, tile_b=128, force_pallas=True)
    jax.block_until_ready(out2)
    assert out2.shape == (B2, OUT)
    assert jnp.allclose(out2, ref_fn(x2), atol=1e-5, rtol=1e-5)

    print("KERNEL_OK")
</pallas_src>

<mosaic_0001>
module attributes {stable_mosaic.version = 11 : i64} {
  func.func @linear_relu_kernel(%arg0: i32, %arg1: memref<8x100xf32, #tpu.memory_space<vmem>>, %arg2: memref<100x10xf32, #tpu.memory_space<vmem>>, %arg3: memref<1x10xf32, #tpu.memory_space<vmem>>, %arg4: memref<8x10xf32, #tpu.memory_space<vmem>>) attributes {dimension_semantics = [#tpu.dimension_semantics<parallel>], iteration_bounds = array<i64: 1>, scalar_prefetch = 0 : i64, scratch_operands = 0 : i64, tpu.core_type = #tpu.core_type<tc>, window_params = [{transform_indices = @transform_0, window_bounds = array<i64: 8, 100>}, {pipeline_mode = #tpu.pipeline_mode<synchronous>, transform_indices = @transform_1, window_bounds = array<i64: 100, 10>}, {pipeline_mode = #tpu.pipeline_mode<synchronous>, transform_indices = @transform_2, window_bounds = array<i64: 1, 10>}, {transform_indices = @transform_3, window_bounds = array<i64: 8, 10>}]} {
    %c0 = arith.constant 0 : index
    %c0_0 = arith.constant 0 : index
    %0 = vector.load %arg1[%c0, %c0_0] : memref<8x100xf32, #tpu.memory_space<vmem>>, vector<8x100xf32>
    %c0_1 = arith.constant 0 : index
    %c0_2 = arith.constant 0 : index
    %1 = vector.load %arg2[%c0_1, %c0_2] : memref<100x10xf32, #tpu.memory_space<vmem>>, vector<100x10xf32>
    %cst = arith.constant dense<0.000000e+00> : vector<8x10xf32>
    %2 = tpu.matmul %0, %1, %cst {dimension_numbers = #tpu.dot_dimension_numbers<[1], [0], [0], [1], [0, 0, 1, 1], [], []>} : vector<8x100xf32>, vector<100x10xf32>, vector<8x10xf32> -> vector<8x10xf32>
    %c0_3 = arith.constant 0 : index
    %c0_4 = arith.constant 0 : index
    %3 = vector.load %arg3[%c0_3, %c0_4] : memref<1x10xf32, #tpu.memory_space<vmem>>, vector<1x10xf32>
    %4 = vector.broadcast %3 : vector<1x10xf32> to vector<8x10xf32>
    %5 = arith.addf %2, %4 : vector<8x10xf32>
    %cst_5 = arith.constant 0.000000e+00 : f32
    %6 = vector.broadcast %cst_5 : f32 to vector<8x10xf32>
    %7 = arith.maximumf %5, %6 : vector<8x10xf32>
    %c0_6 = arith.constant 0 : index
    %c0_7 = arith.constant 0 : index
    %8 = vector.load %arg4[%c0_6, %c0_7] : memref<8x10xf32, #tpu.memory_space<vmem>>, vector<8x10xf32>
    tpu.vector_store %arg4[%c0_6, %c0_7], %7 {strides = array<i32>} : memref<8x10xf32, #tpu.memory_space<vmem>>, vector<8x10xf32>,
    return
  }
  func.func @transform_0(%arg0: i32) -> (i32, i32) {
    %c0_i32 = arith.constant 0 : i32
    %c0_i32_0 = arith.constant 0 : i32
    return %arg0, %c0_i32 : i32, i32
  }
  func.func @transform_1(%arg0: i32) -> (i32, i32) {
    %c0_i32 = arith.constant 0 : i32
    %c0_i32_0 = arith.constant 0 : i32
    %c0_i32_1 = arith.constant 0 : i32
    return %c0_i32, %c0_i32_0 : i32, i32
  }
  func.func @transform_2(%arg0: i32) -> (i32, i32) {
    %c0_i32 = arith.constant 0 : i32
    %c0_i32_0 = arith.constant 0 : i32
    %c0_i32_1 = arith.constant 0 : i32
    return %c0_i32, %c0_i32_0 : i32, i32
  }
  func.func @transform_3(%arg0: i32) -> (i32, i32) {
    %c0_i32 = arith.constant 0 : i32
    %c0_i32_0 = arith.constant 0 : i32
    return %arg0, %c0_i32 : i32, i32
  }
}

</mosaic_0001>

<llo_original>
// kernel: tpu_custom_call.1
$region0: #{tpu_custom_call.1}
  #allocation0 [shape = 'u32[]', space=smem, size = 0x4, offset = 0x4, fixed_abs, tag = 'smem constant byte address 0x4 - core index']
  #allocation1 [shape = 'u32[144,128]{1,0:T(1,128)}', space=vmem, size = 0x12000, scoped, tag = 'internal scratch']
  %s0 = inlined_call_operand.vmem [shape: f32[8,100], index: 0, kind: input, shape index: {}]
  %s1 = inlined_call_operand.vmem [shape: f32[100,10], index: 1, kind: input, shape index: {}]
  %s2 = inlined_call_operand.vmem [shape: f32[1,10], index: 2, kind: input, shape index: {}]
  %s3 = inlined_call_operand.hbm [shape: f32[8,10], index: 3, kind: output, shape index: {}]
  %s4 = sld [smem:[#allocation0]]
  $region22: #{tpu_custom_call.1} parent=0
    _
  %s6 = ssub.s32 1, %s4
  %s7 = scalar_select 0, %s6, %s4
  $region1: #{tpu_custom_call.1} parent=0
    #allocation2 [shape = 'u8[4096]{0}', space=vmem, size = 0x1000, scoped, tag = 'output window, operand 0, single buffered']
    #allocation3 [shape = 's32[1]{0}', space=sflag, size = 0x4, scoped, tag = 'scoped memory for tpu_custom_call.1']
    %8 = vsyncpa [#allocation3], 0
    // Predicated region
    $region2: #{tpu_custom_call.1} parent=1 // pred_check
      _
    $region3: #{tpu_custom_call.1} parent=1 // pred_check_branch
      %10 = sbr.rel (0) target = $region5
    $region4: #{tpu_custom_call.1} parent=1 // pred_region
      _
    $region5: #{tpu_custom_call.1} parent=1 // pred_fallthru
      _
    // Predicated region
    $region6: #{tpu_custom_call.1} parent=1 // pred_check
      _
    $region7: #{tpu_custom_call.1} parent=1 // pred_check_branch
      %12 = sbr.rel (0) target = $region9
    $region8: #{tpu_custom_call.1} parent=1 // pred_region
      _
    $region9: #{tpu_custom_call.1} parent=1 // pred_fallthru
      _
    // Predicated region
    $region10: #{tpu_custom_call.1} parent=1 // pred_check
      _
    $region11: #{tpu_custom_call.1} parent=1 // pred_check_branch
      %14 = sbr.rel (0) target = $region13
    $region12: #{tpu_custom_call.1} parent=1 // pred_region
      _
    $region13: #{tpu_custom_call.1} parent=1 // pred_fallthru
      _
    %v15 = vld [vmem:[%s0] sm:$0xff]
    %v16 = vld [vmem:[%s1] sm:$0xff]
    %v17 = vld [vmem:[%s1 + $0x8] sm:$0xff]
    %v18 = vld [vmem:[%s1 + $0x10] sm:$0xff]
    %v19 = vld [vmem:[%s1 + $0x18] sm:$0xff]
    %v20 = vld [vmem:[%s1 + $0x20] sm:$0xff]
    %v21 = vld [vmem:[%s1 + $0x28] sm:$0xff]
    %v22 = vld [vmem:[%s1 + $0x30] sm:$0xff]
    %v23 = vld [vmem:[%s1 + $0x38] sm:$0xff]
    %v24 = vld [vmem:[%s1 + $0x40] sm:$0xff]
    %v25 = vld [vmem:[%s1 + $0x48] sm:$0xff]
    %v26 = vld [vmem:[%s1 + $0x50] sm:$0xff]
    %v27 = vld [vmem:[%s1 + $0x58] sm:$0xff]
    %v28 = vld [vmem:[%s1 + $0x60] sm:$0xf]
    %v29 = vld [vmem:[%s2] sm:$0x1]
    %v31 = vlaneseq
    %v32 = vshrl.u32 %v31, 7
    %v33 = vsub.s32 0, %v32
    %v34 = vrot.slane %v29, %v33
    %vm36 = vcmask 818176
    %v38 = vsel %vm36, %v15, 0
    %vm40 = vcmask 1043456
    %v42 = vsel %vm40, %v28, 0
    %44 = vmatprep.subr.mxu0 0.0
    %45 = vmatpush1.msra.mxu0 0.0
    %46 = vmatprep.subr.mxu0 0.0
    %47 = vmatpush1.msra.mxu0 0.0
    %48 = vmatprep.subr.mxu0 0.0
    %49 = vmatpush1.msra.mxu0 0.0
    %50 = vmatprep.subr.mxu0 0.0
    %51 = vmatpush1.msra.mxu0 %v42
    %52 = vmatprep.subr.mxu0 0.0
    %53 = vmatpush1.msra.mxu0 %v27
    %54 = vmatprep.subr.mxu0 0.0
    %55 = vmatpush1.msra.mxu0 %v26
    %56 = vmatprep.subr.mxu0 0.0
    %57 = vmatpush1.msra.mxu0 %v25
    %58 = vmatprep.subr.mxu0 0.0
    %59 = vmatpush1.msra.mxu0 %v24
    %60 = vmatprep.subr.mxu0 0.0
    %61 = vmatpush1.msra.mxu0 %v23
    %62 = vmatprep.subr.mxu0 0.0
    %63 = vmatpush1.msra.mxu0 %v22
    %64 = vmatprep.subr.mxu0 0.0
    %65 = vmatpush1.msra.mxu0 %v21
    %66 = vmatprep.subr.mxu0 0.0
    %67 = vmatpush1.msra.mxu0 %v20
    %68 = vmatprep.subr.mxu0 0.0
    %69 = vmatpush1.msra.mxu0 %v19
    %70 = vmatprep.subr.mxu0 0.0
    %71 = vmatpush1.msra.mxu0 %v18
    %72 = vmatprep.subr.mxu0 0.0
    %73 = vmatpush1.msra.mxu0 %v17
    %74 = vmatprep.subr.mxu0 0.0
    %75 = vmatpush1.msra.mxu0 %v16
    %76 = vmatprep.subr.mxu0 0.0
    %77 = vmatpush2.msra.mxu0 0.0
    %78 = vmatprep.subr.mxu0 0.0
    %79 = vmatpush2.msra.mxu0 0.0
    %80 = vmatprep.subr.mxu0 0.0
    %81 = vmatpush2.msra.mxu0 0.0
    %82 = vmatprep.subr.mxu0 0.0
    %83 = vmatpush2.msra.mxu0 0.0
    %84 = vmatprep.subr.mxu0 0.0
    %85 = vmatpush2.msra.mxu0 0.0
    %86 = vmatprep.subr.mxu0 0.0
    %87 = vmatpush2.msra.mxu0 0.0
    %88 = vmatprep.subr.mxu0 0.0
    %89 = vmatpush2.msra.mxu0 0.0
    %90 = vmatprep.subr.mxu0 0.0
    %91 = vmatpush2.msra.mxu0 0.0
    %92 = vmatprep.subr.mxu0 0.0
    %93 = vmatpush2.msra.mxu0 0.0
    %94 = vmatprep.subr.mxu0 0.0
    %95 = vmatpush2.msra.mxu0 0.0
    %96 = vmatprep.subr.mxu0 0.0
    %97 = vmatpush2.msra.mxu0 0.0
    %98 = vmatprep.subr.mxu0 0.0
    %99 = vmatpush2.msra.mxu0 0.0
    %100 = vmatprep.subr.mxu0 0.0
    %101 = vmatpush2.msra.mxu0 0.0
    %102 = vmatprep.subr.mxu0 0.0
    %103 = vmatpush2.msra.mxu0 0.0
    %104 = vmatprep.subr.mxu0 0.0
    %105 = vmatpush2.msra.mxu0 0.0
    %106 = vmatprep.subr.mxu0 0.0
    %107 = vmatpush2.msra.mxu0 0.0
    %108 = vmatprep.mubr.f32.mxu0 0.0
    %109 = vmatmul.mubr.f32.gmra.mxu0 %v38
    %v110 = vpop.f32.mrf.mxu0
    %v111 = vadd.f32 %v34, %v110
    %v112 = vpop.f32.mrf.mxu0
    %113 = vdwg.mxu0
    %v114 = vmax.f32 %v111, 0.0
    %vm115 = vcmask 80896
    %116 = vst.msk [vmem:[#allocation2] sm:$0xff] %vm115, %v114
    // Predicated region
    $region14: #{tpu_custom_call.1} parent=1 // pred_check
      _
    $region15: #{tpu_custom_call.1} parent=1 // pred_check_branch
      %118 = sbr.rel (0) target = $region17
    $region16: #{tpu_custom_call.1} parent=1 // pred_region
      %s120 = ssub.s32 128, 128
      %121 = vsyncadd [#allocation3], %s120
      %s123 = sshll.u32 [#allocation2], 4
      %s124 = int_to_ptr.vmem [resolvable:$true] %s123
      %126 = dma.vmem_to_hbm [thread:$0]  %s124, 128, %s3, [#allocation3]
    $region17: #{tpu_custom_call.1} parent=1 // pred_fallthru
      _
    // Predicated region
    $region18: #{tpu_custom_call.1} parent=1 // pred_check
      _
    $region19: #{tpu_custom_call.1} parent=1 // pred_check_branch
      %128 = sbr.rel (0) target = $region21
    $region20: #{tpu_custom_call.1} parent=1 // pred_region
      %129 = dma.done [#allocation3], 128
    $region21: #{tpu_custom_call.1} parent=1 // pred_fallthru
      _
    %130 = vsyncpa [#allocation3], 1

</llo_original>
